<compile_context>
chip_gen: v5e
topology: v5e:2x2
jax: 0.10.0
libtpu: 0.0.40
codegen_flags: <defaults>
</compile_context>

<pallas_src>
import jax
import jax.numpy as jnp
from jax.experimental import pallas as pl
from jax.experimental.pallas import tpu as pltpu


def _round_up(x, m):
    return (x + m - 1) // m * m


def _default_tile_caps():
    """Generation-aware tile caps: lane dims x128, sublane dims x16 (bf16-safe)."""
    tm_max, tn_max, tk_max = 512, 512, 2048
    try:
        kind = jax.devices()[0].device_kind.lower()
        # v5e: 4x128^2 MXU + 16 MiB default scoped VMEM -> a smaller K tile is plenty.
        if "v5 lite" in kind or "v5e" in kind or "v5lite" in kind:
            tk_max = 1024
    except Exception:
        pass
    return tm_max, tn_max, tk_max


def _tile_sizes(batch, in_size, out_size, caps=None):
    tm_max, tn_max, tk_max = caps if caps is not None else _default_tile_caps()
    tm = min(tm_max, _round_up(batch, 16))       # sublane multiple (bf16-safe)
    tn = min(tn_max, _round_up(out_size, 128))   # lane multiple -> unmasked vst
    tk = min(tk_max, _round_up(in_size, 128))
    # v7x has 2 TensorCores: keep >= 2 parallel output tiles when possible so the
    # "parallel" grid axes can actually shard across cores (prefer splitting M).
    m_pad = _round_up(batch, tm)
    n_pad = _round_up(out_size, tn)
    if (m_pad // tm) * (n_pad // tn) < 2 and m_pad >= 32:
        tm = _round_up((m_pad + 1) // 2, 16)
    return tm, tn, tk


def dense_kernel(x_ref, w_ref, b_ref, a_ref, o_ref):
    # x_ref: (tm, tk) bf16 | w_ref: (tk, tn) bf16 | b_ref: (1, tn) f32
    # a_ref: (1,) f32 in SMEM | o_ref: (tm, tn) f32 (resident across k, doubles
    # as the accumulator since its block index (i, j) is constant over k).
    k = pl.program_id(2)
    partial = jnp.dot(x_ref[...], w_ref[...], preferred_element_type=jnp.float32)

    @pl.when(k == 0)
    def _():
        o_ref[...] = partial                     # assign, no zero-fill RMW

    @pl.when(k > 0)
    def _():
        o_ref[...] += partial

    @pl.when(k == pl.num_programs(2) - 1)
    def _():
        y = o_ref[...] + b_ref[...]              # bias broadcast over rows (f32)
        a = a_ref[0]                             # shared PReLU slope (SMEM scalar)
        o_ref[...] = jnp.where(y > 0, y, a * y).astype(o_ref.dtype)


def prepare_dense_params(weight, bias, prelu_alpha, mxu_dtype=jnp.bfloat16):
    """One-time parameter prep (transpose / pad-to-128 / cast) — at init, not per call."""
    out_size, in_size = weight.shape
    k_pad = _round_up(in_size, 128)
    n_pad = _round_up(out_size, 128)

    w_p = jnp.pad(
        weight.T.astype(mxu_dtype),                          # (in_size, out_size)
        ((0, k_pad - in_size), (0, n_pad - out_size)),
    )                                                        # (K_pad, N_pad) bf16
    b_p = jnp.pad(
        bias.astype(jnp.float32).reshape(1, out_size),
        ((0, 0), (0, n_pad - out_size)),
    )                                                        # (1, N_pad) f32
    a_p = jnp.asarray(prelu_alpha, jnp.float32).reshape(1)   # (1,) f32 -> SMEM

    return dict(
        w=w_p, b=b_p, a=a_p,
        weight_f32=weight.astype(jnp.float32),               # for the XLA fallback
        bias_f32=bias.astype(jnp.float32),
        in_size=in_size, out_size=out_size, mxu_dtype=mxu_dtype,
    )


def _dense_xla(x, params):
    """Fused plain-XLA path for tiny layers (lane padding would waste the MXU)."""
    y = x @ params["weight_f32"].T + params["bias_f32"]
    a = params["a"][0]
    return jnp.where(y > 0, y, a * y)


def _use_xla_fallback(batch, in_size, out_size):
    return in_size < 128 or out_size < 128 or (2 * batch * in_size * out_size) < (1 << 21)


def dense_forward(x, params, *, force_pallas=False, tile_caps=None):
    """x: (B, in_size) f32/bf16. Returns (B, out_size) f32 = PReLU(x @ W^T + b)."""
    in_size, out_size = params["in_size"], params["out_size"]
    mxu_dtype = params["mxu_dtype"]
    B = x.shape[0]
    assert x.shape[1] == in_size

    if not force_pallas and _use_xla_fallback(B, in_size, out_size):
        return _dense_xla(x.astype(jnp.float32), params)

    w_p, b_p, a_p = params["w"], params["b"], params["a"]
    tm, tn, tk = _tile_sizes(B, in_size, out_size, caps=tile_caps)

    # Re-pad weight/bias only if the chosen tiles don't divide the prepped pad
    # (only happens for unusual tile-cap overrides; jit-cached when it does).
    k_pad = _round_up(w_p.shape[0], tk)
    n_pad = _round_up(w_p.shape[1], tn)
    if (k_pad, n_pad) != w_p.shape:
        w_p = jnp.pad(w_p, ((0, k_pad - w_p.shape[0]), (0, n_pad - w_p.shape[1])))
        b_p = jnp.pad(b_p, ((0, 0), (0, n_pad - b_p.shape[1])))

    m_pad = _round_up(B, tm)

    # Dropout (eval mode) is the identity -> no-op.
    # Conditional pad/cast: skip the extra HBM round trip when already aligned.
    x_p = x if x.dtype == mxu_dtype else x.astype(mxu_dtype)
    if m_pad != B or k_pad != in_size:
        x_p = jnp.pad(x_p, ((0, m_pad - B), (0, k_pad - in_size)))

    grid = (m_pad // tm, n_pad // tn, k_pad // tk)
    grid_m, grid_n, _ = grid

    cost = pl.CostEstimate(
        flops=2 * m_pad * k_pad * n_pad,
        transcendentals=0,
        bytes_accessed=(
            m_pad * k_pad * x_p.dtype.itemsize * grid_n      # x streamed per N tile
            + k_pad * n_pad * w_p.dtype.itemsize * grid_m    # W streamed per M tile
            + m_pad * n_pad * 4                               # f32 output write
        ),
    )

    out_p = pl.pallas_call(
        dense_kernel,
        out_shape=jax.ShapeDtypeStruct((m_pad, n_pad), jnp.float32),
        grid=grid,
        in_specs=[
            pl.BlockSpec((tm, tk), lambda i, j, k: (i, k)),       # x tile
            pl.BlockSpec((tk, tn), lambda i, j, k: (k, j)),       # W^T tile
            pl.BlockSpec((1, tn), lambda i, j, k: (0, j)),        # bias tile
            pl.BlockSpec(memory_space=pltpu.MemorySpace.SMEM),     # PReLU alpha
        ],
        out_specs=pl.BlockSpec((tm, tn), lambda i, j, k: (i, j)),
        compiler_params=pltpu.CompilerParams(
            dimension_semantics=("parallel", "parallel", "arbitrary"),
        ),
        cost_estimate=cost,
    )(x_p, w_p, b_p, a_p)

    return out_p[:B, :out_size]


if __name__ == "__main__":
    key = jax.random.PRNGKey(0)
    k_x, k_w, k_b, k_x2, k_w2, k_b2 = jax.random.split(key, 6)

    # ---- Test 1: tiny Dense (8 x 32 -> 16), Pallas path forced + XLA fallback ----
    B, in_size, out_size = 8, 32, 16
    x = jax.random.normal(k_x, (B, in_size), dtype=jnp.float32)
    bound = 1.0 / (in_size ** 0.5)
    weight = jax.random.uniform(k_w, (out_size, in_size), jnp.float32, -bound, bound)
    bias = jax.random.uniform(k_b, (out_size,), jnp.float32, -bound, bound)
    prelu_alpha = jnp.float32(0.25)                     # nn.PReLU default init

    params = prepare_dense_params(weight, bias, prelu_alpha)

    out = jax.block_until_ready(dense_forward(x, params, force_pallas=True))
    # Reference: inputs rounded to bf16 (matching MXU input dtype), f32 accumulate.
    xb = x.astype(jnp.bfloat16).astype(jnp.float32)
    wb = weight.astype(jnp.bfloat16).astype(jnp.float32)
    y_ref = xb @ wb.T + bias
    ref = jnp.where(y_ref > 0, y_ref, prelu_alpha * y_ref)
    assert out.shape == (B, out_size) and out.dtype == jnp.float32
    assert jnp.allclose(out, ref, atol=1e-3, rtol=1e-3), float(jnp.max(jnp.abs(out - ref)))

    out_fb = jax.block_until_ready(dense_forward(x, params))   # tiny -> XLA fallback
    y_f32 = x @ weight.T + bias
    ref_f32 = jnp.where(y_f32 > 0, y_f32, prelu_alpha * y_f32)
    assert jnp.allclose(out_fb, ref_f32, atol=1e-5, rtol=1e-5)

    # ---- Test 2: multi-step K reduction (8 x 256 -> 128) with small tile caps ----
    B2, in2, out2 = 8, 256, 128
    x2 = jax.random.normal(k_x2, (B2, in2), dtype=jnp.float32)
    bound2 = 1.0 / (in2 ** 0.5)
    weight2 = jax.random.uniform(k_w2, (out2, in2), jnp.float32, -bound2, bound2)
    bias2 = jax.random.uniform(k_b2, (out2,), jnp.float32, -bound2, bound2)
    params2 = prepare_dense_params(weight2, bias2, prelu_alpha)

    out2_p = jax.block_until_ready(
        dense_forward(x2, params2, force_pallas=True, tile_caps=(16, 128, 128))
    )
    x2b = x2.astype(jnp.bfloat16).astype(jnp.float32)
    w2b = weight2.astype(jnp.bfloat16).astype(jnp.float32)
    y2_ref = x2b @ w2b.T + bias2
    ref2 = jnp.where(y2_ref > 0, y2_ref, prelu_alpha * y2_ref)
    assert out2_p.shape == (B2, out2) and out2_p.dtype == jnp.float32
    assert jnp.allclose(out2_p, ref2, atol=1e-3, rtol=1e-3), float(
        jnp.max(jnp.abs(out2_p - ref2))
    )

    print("KERNEL_OK")
</pallas_src>

<mosaic_0001>
module attributes {stable_mosaic.version = 11 : i64} {
  func.func @dense_kernel(%arg0: i32, %arg1: i32, %arg2: i32, %arg3: memref<16x128xbf16, #tpu.memory_space<vmem>>, %arg4: memref<128x128xbf16, #tpu.memory_space<vmem>>, %arg5: memref<1x128xf32, #tpu.memory_space<vmem>>, %arg6: memref<1xf32, #tpu.memory_space<smem>>, %arg7: memref<16x128xf32, #tpu.memory_space<vmem>>) attributes {dimension_semantics = [#tpu.dimension_semantics<parallel>, #tpu.dimension_semantics<parallel>, #tpu.dimension_semantics<arbitrary>], iteration_bounds = array<i64: 1, 1, 1>, scalar_prefetch = 0 : i64, scratch_operands = 0 : i64, tpu.core_type = #tpu.core_type<tc>, window_params = [{transform_indices = @transform_0, window_bounds = array<i64: 16, 128>}, {transform_indices = @transform_1, window_bounds = array<i64: 128, 128>}, {transform_indices = @transform_2, window_bounds = array<i64: 1, 128>}, {transform_indices = @transform_3, window_bounds = array<i64: 1>}, {transform_indices = @transform_4, window_bounds = array<i64: 16, 128>}]} {
    %c0 = arith.constant 0 : index
    %c0_0 = arith.constant 0 : index
    %0 = vector.load %arg3[%c0, %c0_0] : memref<16x128xbf16, #tpu.memory_space<vmem>>, vector<16x128xbf16>
    %c0_1 = arith.constant 0 : index
    %c0_2 = arith.constant 0 : index
    %1 = vector.load %arg4[%c0_1, %c0_2] : memref<128x128xbf16, #tpu.memory_space<vmem>>, vector<128x128xbf16>
    %cst = arith.constant dense<0.000000e+00> : vector<16x128xf32>
    %2 = tpu.matmul %0, %1, %cst {dimension_numbers = #tpu.dot_dimension_numbers<[1], [0], [0], [1], [0, 0, 1, 1], [], []>} : vector<16x128xbf16>, vector<128x128xbf16>, vector<16x128xf32> -> vector<16x128xf32>
    %c0_i32 = arith.constant 0 : i32
    %3 = arith.cmpi eq, %arg2, %c0_i32 : i32
    %4 = arith.extui %3 : i1 to i32
    %c0_i32_3 = arith.constant 0 : i32
    %5 = arith.cmpi ne, %4, %c0_i32_3 : i32
    scf.if %5 {
      %c0_8 = arith.constant 0 : index
      %c0_9 = arith.constant 0 : index
      %12 = vector.load %arg7[%c0_8, %c0_9] : memref<16x128xf32, #tpu.memory_space<vmem>>, vector<16x128xf32>
      tpu.vector_store %arg7[%c0_8, %c0_9], %2 {strides = array<i32>} : memref<16x128xf32, #tpu.memory_space<vmem>>, vector<16x128xf32>,
    } else {
    }
    %c0_i32_4 = arith.constant 0 : i32
    %6 = arith.cmpi sgt, %arg2, %c0_i32_4 : i32
    %7 = arith.extui %6 : i1 to i32
    %c0_i32_5 = arith.constant 0 : i32
    %8 = arith.cmpi ne, %7, %c0_i32_5 : i32
    scf.if %8 {
      %c0_8 = arith.constant 0 : index
      %c0_9 = arith.constant 0 : index
      %12 = vector.load %arg7[%c0_8, %c0_9] : memref<16x128xf32, #tpu.memory_space<vmem>>, vector<16x128xf32>
      %13 = arith.addf %12, %2 : vector<16x128xf32>
      %c0_10 = arith.constant 0 : index
      %c0_11 = arith.constant 0 : index
      %14 = vector.load %arg7[%c0_10, %c0_11] : memref<16x128xf32, #tpu.memory_space<vmem>>, vector<16x128xf32>
      tpu.vector_store %arg7[%c0_10, %c0_11], %13 {strides = array<i32>} : memref<16x128xf32, #tpu.memory_space<vmem>>, vector<16x128xf32>,
    } else {
    }
    %c0_i32_6 = arith.constant 0 : i32
    %9 = arith.cmpi eq, %arg2, %c0_i32_6 : i32
    %10 = arith.extui %9 : i1 to i32
    %c0_i32_7 = arith.constant 0 : i32
    %11 = arith.cmpi ne, %10, %c0_i32_7 : i32
    scf.if %11 {
      %c0_8 = arith.constant 0 : index
      %c0_9 = arith.constant 0 : index
      %12 = vector.load %arg7[%c0_8, %c0_9] : memref<16x128xf32, #tpu.memory_space<vmem>>, vector<16x128xf32>
      %c0_10 = arith.constant 0 : index
      %c0_11 = arith.constant 0 : index
      %13 = vector.load %arg5[%c0_10, %c0_11] : memref<1x128xf32, #tpu.memory_space<vmem>>, vector<1x128xf32>
      %14 = vector.broadcast %13 : vector<1x128xf32> to vector<16x128xf32>
      %15 = arith.addf %12, %14 : vector<16x128xf32>
      %c0_12 = arith.constant 0 : index
      %16 = memref.load %arg6[%c0_12] : memref<1xf32, #tpu.memory_space<smem>>
      %cst_13 = arith.constant 0.000000e+00 : f32
      %17 = vector.broadcast %cst_13 : f32 to vector<16x128xf32>
      %18 = arith.cmpf ogt, %15, %17 : vector<16x128xf32>
      %19 = vector.broadcast %16 : f32 to vector<16x128xf32>
      %20 = arith.mulf %19, %15 : vector<16x128xf32>
      %21 = arith.select %18, %15, %20 : vector<16x128xi1>, vector<16x128xf32>
      %c0_14 = arith.constant 0 : index
      %c0_15 = arith.constant 0 : index
      %22 = vector.load %arg7[%c0_14, %c0_15] : memref<16x128xf32, #tpu.memory_space<vmem>>, vector<16x128xf32>
      tpu.vector_store %arg7[%c0_14, %c0_15], %21 {strides = array<i32>} : memref<16x128xf32, #tpu.memory_space<vmem>>, vector<16x128xf32>,
    } else {
    }
    return
  }
  func.func @transform_0(%arg0: i32, %arg1: i32, %arg2: i32) -> (i32, i32) {
    %c0_i32 = arith.constant 0 : i32
    return %arg0, %arg2 : i32, i32
  }
  func.func @transform_1(%arg0: i32, %arg1: i32, %arg2: i32) -> (i32, i32) {
    %c0_i32 = arith.constant 0 : i32
    return %arg2, %arg1 : i32, i32
  }
  func.func @transform_2(%arg0: i32, %arg1: i32, %arg2: i32) -> (i32, i32) {
    %c0_i32 = arith.constant 0 : i32
    %c0_i32_0 = arith.constant 0 : i32
    return %c0_i32, %arg1 : i32, i32
  }
  func.func @transform_3(%arg0: i32, %arg1: i32, %arg2: i32) -> i32 {
    %c0_i32 = arith.constant 0 : i32
    %c0_i32_0 = arith.constant 0 : i32
    return %c0_i32 : i32
  }
  func.func @transform_4(%arg0: i32, %arg1: i32, %arg2: i32) -> (i32, i32) {
    %c0_i32 = arith.constant 0 : i32
    return %arg0, %arg1 : i32, i32
  }
}

</mosaic_0001>

<llo_original>
// kernel: tpu_custom_call.1
$region0: #{tpu_custom_call.1}
  #allocation0 [shape = 'u32[]', space=smem, size = 0x4, offset = 0x4, fixed_abs, tag = 'smem constant byte address 0x4 - core index']
  #allocation1 [shape = 'u32[72,128]{1,0:T(1,128)}', space=vmem, size = 0x9000, scoped, tag = 'internal scratch']
  #allocation2 [shape = 'f32[1]{0:T(128)S(6)}', space=smem, size = 0x200, scoped, tag = 'scoped memory for tpu_custom_call.1']
  %s0 = inlined_call_operand.hbm [shape: bf16[16,128], index: 0, kind: input, shape index: {}]
  %s1 = inlined_call_operand.hbm [shape: bf16[128,128], index: 1, kind: input, shape index: {}]
  %s2 = inlined_call_operand.vmem [shape: f32[1,128], index: 2, kind: input, shape index: {}]
  %s3 = inlined_call_operand.<no memory space> [shape: f32[1], index: 3, kind: input, shape index: {}]
  %s4 = inlined_call_operand.hbm [shape: f32[16,128], index: 4, kind: output, shape index: {}]
  %s5 = sld [smem:[#allocation0]]
  $region46: #{tpu_custom_call.1} parent=0
    _
  %s7 = ssub.s32 1, %s5
  %s8 = scalar_select 0, %s7, %s5
  %9 = sst [smem:[#allocation2]] %s3
  $region1: #{tpu_custom_call.1} parent=0
    #allocation3 [shape = 'u8[4096]{0}', space=vmem, size = 0x1000, scoped, tag = 'input window, operand 0, single buffered']
    #allocation4 [shape = 's32[1]{0}', space=sflag, size = 0x4, scoped, tag = 'scoped memory for tpu_custom_call.1']
    #allocation5 [shape = 's32[1]{0}', space=sflag, size = 0x4, scoped, tag = 'scoped memory for tpu_custom_call.1']
    #allocation6 [shape = 'u8[32768]{0}', space=vmem, size = 0x8000, scoped, tag = 'input window, operand 1, single buffered']
    #allocation7 [shape = 's32[1]{0}', space=sflag, size = 0x4, scoped, tag = 'scoped memory for tpu_custom_call.1']
    #allocation8 [shape = 'u8[8192]{0}', space=vmem, size = 0x2000, scoped, tag = 'output window, operand 0, single buffered']
    %10 = vsyncpa [#allocation4], 0
    %11 = vsyncpa [#allocation7], 0
    %12 = vsyncpa [#allocation5], 0
    // Predicated region
    $region2: #{tpu_custom_call.1} parent=1 // pred_check
      _
    $region3: #{tpu_custom_call.1} parent=1 // pred_check_branch
      %14 = sbr.rel (0) target = $region5
    $region4: #{tpu_custom_call.1} parent=1 // pred_region
      %16 = vsyncadd [#allocation4], 0
      %s17 = sshll.u32 %s0, 4
      %s18 = int_to_ptr.hbm [resolvable:$true] %s17
      %s19 = sshll.u32 [#allocation3], 4
      %s20 = int_to_ptr.vmem [resolvable:$true] %s19
      %25 = dma.hbm_to_vmem [thread:$0]  %s18, 128, %s20, [#allocation4], 64, 64, 4
    $region5: #{tpu_custom_call.1} parent=1 // pred_fallthru
      _
    // Predicated region
    $region6: #{tpu_custom_call.1} parent=1 // pred_check
      _
    $region7: #{tpu_custom_call.1} parent=1 // pred_check_branch
      %27 = sbr.rel (0) target = $region9
    $region8: #{tpu_custom_call.1} parent=1 // pred_region
      %29 = vsyncadd [#allocation7], 0
      %s30 = sshll.u32 %s1, 4
      %s31 = int_to_ptr.hbm [resolvable:$true] %s30
      %s32 = sshll.u32 [#allocation6], 4
      %s33 = int_to_ptr.vmem [resolvable:$true] %s32
      %38 = dma.hbm_to_vmem [thread:$0]  %s31, 1024, %s33, [#allocation7], 64, 64, 4
    $region9: #{tpu_custom_call.1} parent=1 // pred_fallthru
      _
    // Predicated region
    $region10: #{tpu_custom_call.1} parent=1 // pred_check
      _
    $region11: #{tpu_custom_call.1} parent=1 // pred_check_branch
      %40 = sbr.rel (0) target = $region13
    $region12: #{tpu_custom_call.1} parent=1 // pred_region
      _
    $region13: #{tpu_custom_call.1} parent=1 // pred_fallthru
      _
    // Predicated region
    $region14: #{tpu_custom_call.1} parent=1 // pred_check
      _
    $region15: #{tpu_custom_call.1} parent=1 // pred_check_branch
      %42 = sbr.rel (0) target = $region17
    $region16: #{tpu_custom_call.1} parent=1 // pred_region
      _
    $region17: #{tpu_custom_call.1} parent=1 // pred_fallthru
      _
    // Predicated region
    $region18: #{tpu_custom_call.1} parent=1 // pred_check
      _
    $region19: #{tpu_custom_call.1} parent=1 // pred_check_branch
      %44 = sbr.rel (0) target = $region21
    $region20: #{tpu_custom_call.1} parent=1 // pred_region
      %46 = dma.done [#allocation4], 128
    $region21: #{tpu_custom_call.1} parent=1 // pred_fallthru
      _
    // Predicated region
    $region22: #{tpu_custom_call.1} parent=1 // pred_check
      _
    $region23: #{tpu_custom_call.1} parent=1 // pred_check_branch
      %48 = sbr.rel (0) target = $region25
    $region24: #{tpu_custom_call.1} parent=1 // pred_region
      %50 = dma.done [#allocation7], 1024
    $region25: #{tpu_custom_call.1} parent=1 // pred_fallthru
      _
    %v51 = vld [vmem:[#allocation3] sm:$0xf]
    %v52 = vld [vmem:[#allocation3 + $0x4] sm:$0xf]
    %v53 = vld [vmem:[#allocation6] sm:$0xf]
    %v54 = vld [vmem:[#allocation6 + $0x4] sm:$0xf]
    %v55 = vld [vmem:[#allocation6 + $0x8] sm:$0xf]
    %v56 = vld [vmem:[#allocation6 + $0xc] sm:$0xf]
    %v57 = vld [vmem:[#allocation6 + $0x10] sm:$0xf]
    %v58 = vld [vmem:[#allocation6 + $0x14] sm:$0xf]
    %v59 = vld [vmem:[#allocation6 + $0x18] sm:$0xf]
    %v60 = vld [vmem:[#allocation6 + $0x1c] sm:$0xf]
    %v61 = vld [vmem:[#allocation6 + $0x20] sm:$0xf]
    %v62 = vld [vmem:[#allocation6 + $0x24] sm:$0xf]
    %v63 = vld [vmem:[#allocation6 + $0x28] sm:$0xf]
    %v64 = vld [vmem:[#allocation6 + $0x2c] sm:$0xf]
    %v65 = vld [vmem:[#allocation6 + $0x30] sm:$0xf]
    %v66 = vld [vmem:[#allocation6 + $0x34] sm:$0xf]
    %v67 = vld [vmem:[#allocation6 + $0x38] sm:$0xf]
    %v68 = vld [vmem:[#allocation6 + $0x3c] sm:$0xf]
    %v71 = vunpack.c.l.b16 %v51
    %v72 = vunpack.c.l.b16 %v52
    %v73 = vpack.c.b16 %v72, %v71
    %v91 = vunpack.c.l.b16 %v53
    %v92 = vunpack.c.l.b16 %v54
    %v93 = vunpack.c.l.b16 %v55
    %v94 = vunpack.c.l.b16 %v56
    %v95 = vunpack.c.l.b16 %v57
    %v96 = vunpack.c.l.b16 %v58
    %v97 = vunpack.c.l.b16 %v59
    %v98 = vunpack.c.l.b16 %v60
    %v99 = vunpack.c.l.b16 %v61
    %v100 = vunpack.c.l.b16 %v62
    %v101 = vunpack.c.l.b16 %v63
    %v102 = vunpack.c.l.b16 %v64
    %v103 = vunpack.c.l.b16 %v65
    %v104 = vunpack.c.l.b16 %v66
    %v105 = vunpack.c.l.b16 %v67
    %v106 = vunpack.c.l.b16 %v68
    %v107 = vpack.c.b16 %v92, %v91
    %v108 = vpack.c.b16 %v94, %v93
    %v109 = vpack.c.b16 %v96, %v95
    %v110 = vpack.c.b16 %v98, %v97
    %v111 = vpack.c.b16 %v100, %v99
    %v112 = vpack.c.b16 %v102, %v101
    %v113 = vpack.c.b16 %v104, %v103
    %v114 = vpack.c.b16 %v106, %v105
    %123 = vmatpush.bf16.msra.mxu0 %v114
    %124 = vmatpush.bf16.msra.mxu0 %v113
    %125 = vmatpush.bf16.msra.mxu0 %v112
    %126 = vmatpush.bf16.msra.mxu0 %v111
    %127 = vmatpush.bf16.msra.mxu0 %v110
    %128 = vmatpush.bf16.msra.mxu0 %v109
    %129 = vmatpush.bf16.msra.mxu0 %v108
    %130 = vmatpush.bf16.msra.mxu0 %v107
    %131 = vmatmul.bf16.gmra.mxu0 %v73
    %v132 = vpop.f32.mrf.mxu0
    %v133 = vadd.f32 0.0, %v132
    %v134 = vpop.f32.mrf.mxu0
    %v135 = vadd.f32 0.0, %v134
    %136 = vdwg.mxu0
    %p137 = scmp.eq.s32.totalorder 0, 0
    // Predicated region
    $region26: #{tpu_custom_call.1} parent=1 // pred_check
      %p138 = pneg %p137
    $region27: #{tpu_custom_call.1} parent=1 // pred_check_branch
      %140 = sbr.rel (%p138) target = $region29
    $region28: #{tpu_custom_call.1} parent=1 // pred_region
      %141 = vst [vmem:[#allocation8] sm:$0xff] %v133
      %142 = vst [vmem:[#allocation8 + $0x8] sm:$0xff] %v135
    $region29: #{tpu_custom_call.1} parent=1 // pred_fallthru
      _
    %p143 = scmp.gt.s32.totalorder 0, 0
    // Predicated region
    $region30: #{tpu_custom_call.1} parent=1 // pred_check
      %p144 = pneg %p143
    $region31: #{tpu_custom_call.1} parent=1 // pred_check_branch
      %146 = sbr.rel (%p144) target = $region33
    $region32: #{tpu_custom_call.1} parent=1 // pred_region
      %v147 = vld [vmem:[#allocation8] sm:$0xff]
      %v148 = vld [vmem:[#allocation8 + $0x8] sm:$0xff]
      %v149 = vadd.f32 %v147, %v133
      %v150 = vadd.f32 %v148, %v135
      %151 = vst [vmem:[#allocation8] sm:$0xff] %v149
      %152 = vst [vmem:[#allocation8 + $0x8] sm:$0xff] %v150
    $region33: #{tpu_custom_call.1} parent=1 // pred_fallthru
      _
    // Predicated region
    $region34: #{tpu_custom_call.1} parent=1 // pred_check
      %p153 = pneg %p137
    $region35: #{tpu_custom_call.1} parent=1 // pred_check_branch
      %155 = sbr.rel (%p153) target = $region37
    $region36: #{tpu_custom_call.1} parent=1 // pred_region
      %v156 = vld [vmem:[#allocation8] sm:$0xff]
      %v157 = vld [vmem:[#allocation8 + $0x8] sm:$0xff]
      %v158 = vld [vmem:[%s2] sm:$0x1]
      %v160 = vperm.slane %v158, 0
      %v162 = vadd.f32 %v156, %v160
      %v163 = vadd.f32 %v157, %v160
      %s164 = sld [smem:[#allocation2]]
      %vm165 = vcmp.gt.f32.partialorder %v162, 0.0
      %vm166 = vcmp.gt.f32.partialorder %v163, 0.0
      %v167 = vstv %s164
      %v168 = vmul.f32 %v167, %v162
      %v169 = vmul.f32 %v167, %v163
      %v170 = vsel %vm165, %v162, %v168
      %v171 = vsel %vm166, %v163, %v169
      %172 = vst [vmem:[#allocation8] sm:$0xff] %v170
      %173 = vst [vmem:[#allocation8 + $0x8] sm:$0xff] %v171
    $region37: #{tpu_custom_call.1} parent=1 // pred_fallthru
      _
    // Predicated region
    $region38: #{tpu_custom_call.1} parent=1 // pred_check
      _
    $region39: #{tpu_custom_call.1} parent=1 // pred_check_branch
      %175 = sbr.rel (0) target = $region41
    $region40: #{tpu_custom_call.1} parent=1 // pred_region
      %177 = vsyncadd [#allocation5], 0
      %s178 = sshll.u32 [#allocation8], 4
      %s179 = int_to_ptr.vmem [resolvable:$true] %s178
      %s180 = sshll.u32 %s4, 4
      %s181 = int_to_ptr.hbm [resolvable:$true] %s180
      %186 = dma.vmem_to_hbm [thread:$0]  %s179, 256, %s181, [#allocation5], 128, 128, 8
    $region41: #{tpu_custom_call.1} parent=1 // pred_fallthru
      _
    // Predicated region
    $region42: #{tpu_custom_call.1} parent=1 // pred_check
      _
    $region43: #{tpu_custom_call.1} parent=1 // pred_check_branch
      %188 = sbr.rel (0) target = $region45
    $region44: #{tpu_custom_call.1} parent=1 // pred_region
      %190 = dma.done [#allocation5], 256
    $region45: #{tpu_custom_call.1} parent=1 // pred_fallthru
      _
    %191 = vsyncpa [#allocation4], 1
    %192 = vsyncpa [#allocation7], 1
    %193 = vsyncpa [#allocation5], 1

</llo_original>
